<compile_context>
chip_gen: v7x
topology: tpu7x:2x2x1
jax: 0.10.0
libtpu: 0.0.40
codegen_flags: <defaults>
</compile_context>

<pallas_src>
import math
import random
from functools import lru_cache, partial

import jax
import jax.numpy as jnp
from jax import lax
from jax.experimental import pallas as pl
from jax.experimental.pallas import tpu as pltpu


def _round_up(x: int, m: int) -> int:
    return ((x + m - 1) // m) * m


@lru_cache(maxsize=1)
def _tpu_defaults():
    """(num_tensorcores, vmem_limit_bytes) for the local TPU, safe fallbacks."""
    cores = 1
    vmem_cap = 0
    try:
        info = pltpu.get_tpu_info()
        vmem_cap = int(getattr(info, "vmem_capacity_bytes", 0) or 0)
        for name in ("num_cores", "tensor_cores_per_chip", "cores_per_chip"):
            v = getattr(info, name, None)
            if v:
                cores = max(cores, int(v))
                break
    except Exception:
        pass
    try:
        kind = jax.devices()[0].device_kind.lower()
    except Exception:
        kind = ""
    is_v7 = ("v7" in kind) or ("7x" in kind)
    if is_v7 or ("v4" in kind) or ("v5p" in kind):
        cores = max(cores, 2)                      # dual-TC / megacore parts
    if vmem_cap <= 0:
        vmem_cap = (64 if is_v7 else 128) * 1024 * 1024
    vmem_limit = min(int(vmem_cap * 0.80), 100 * 1024 * 1024)
    if is_v7:                                      # 64 MiB per TC: stay below it
        vmem_limit = min(vmem_limit, 52 * 1024 * 1024)
    vmem_limit = max(vmem_limit, 32 * 1024 * 1024)
    return cores, vmem_limit


def _interp_matrix(in_size: int, scale: float) -> jnp.ndarray:
    """(out, in) bilinear interpolation matrix matching PyTorch
    F.interpolate(mode='bilinear', align_corners=False) with scale_factor used
    directly in the coordinate transform (recompute_scale_factor=None)."""
    out_size = int(math.floor(in_size * scale))
    dst = jnp.arange(out_size, dtype=jnp.float32)
    src = (dst + 0.5) / jnp.float32(scale) - 0.5
    src = jnp.maximum(src, 0.0)                    # PyTorch clamps negatives to 0
    i0 = jnp.floor(src).astype(jnp.int32)
    i0 = jnp.clip(i0, 0, in_size - 1)
    i1 = jnp.minimum(i0 + 1, in_size - 1)
    l1 = src - i0.astype(jnp.float32)
    l0 = 1.0 - l1
    m = jnp.zeros((out_size, in_size), jnp.float32)
    rows = jnp.arange(out_size)
    m = m.at[rows, i0].add(l0)
    m = m.at[rows, i1].add(l1)
    return m


def _resize_kernel(x_ref, awt_ref, ah_ref, o_ref, xw_ref):
    # x_ref:   (B*H_pad, W_inP)   stacked plane block (contiguous HBM DMA)
    # awt_ref: (W_inP, W_padO)    width interp matrix, zero-padded rows/cols
    # ah_ref:  (H_out, H_pad)     height interp matrix, zero-padded cols
    # o_ref:   (B, H_out, W_padO) per-plane lane-dense output block (contiguous)
    # xw_ref:  (B*H_pad, W_padO)  VMEM scratch staging the width-pass result
    b = o_ref.shape[0]
    h_pad = ah_ref.shape[1]
    cdt = awt_ref.dtype

    # Pass 1 (width): one fused GEMM; M = B*H_pad fills MXU rows, K = W_inP.
    x = x_ref[...].astype(cdt)                     # int inputs cast (no int MXU on v7x)
    xw_ref[...] = jnp.dot(x, awt_ref[...],
                          preferred_element_type=jnp.float32).astype(cdt)

    # Pass 2 (height): per-plane GEMMs off the scratch; A_h load hoisted once.
    ah = ah_ref[...]
    out_is_int = jnp.issubdtype(o_ref.dtype, jnp.integer)

    def emit_plane(pi, row_start):
        plane = xw_ref[pl.ds(row_start, h_pad), :]             # 8-aligned slice
        res = jnp.dot(ah, plane, preferred_element_type=jnp.float32)
        if out_is_int:
            res = jnp.round(res)                   # integer images: round, don't truncate
        o_ref[pi] = res.astype(o_ref.dtype)        # full-width, 128-aligned store

    if b <= 32:                                    # short block: static unroll
        for pi in range(b):
            emit_plane(pi, pi * h_pad)
    else:                                          # long block: bounded code/live ranges
        def body(pi, carry):
            emit_plane(pi, pl.multiple_of(pi * h_pad, 8))
            return carry
        lax.fori_loop(0, b, body, 0)


@partial(jax.jit, static_argnames=("scale", "compute_dtype",
                                   "vmem_limit_bytes", "num_cores"))
def _bilinear_resize_impl(x_nchw, scale, compute_dtype, vmem_limit_bytes, num_cores):
    n, c, h_in, w_in = x_nchw.shape
    h_out = int(math.floor(h_in * scale))
    w_out = int(math.floor(w_in * scale))
    p = n * c

    cdt = jnp.dtype(compute_dtype)
    c_bytes = cdt.itemsize
    io_bytes = jnp.dtype(x_nchw.dtype).itemsize

    sub = 16 if c_bytes == 2 else 8                # bf16 packs 2 rows per sublane
    h_pad = _round_up(h_in, sub)
    w_in_pad = _round_up(w_in, 128)                # lane-aligned input / pass-1 K
    w_pad_out = _round_up(w_out, 128)              # lane-dense output width

    # Interpolation matrices (zero padding keeps padded rows/cols at 0).
    a_h = _interp_matrix(h_in, scale)
    a_h = jnp.pad(a_h, ((0, 0), (0, h_pad - h_in))).astype(cdt)           # (h_out, h_pad)
    a_w_t = _interp_matrix(w_in, scale).T
    a_w_t = jnp.pad(a_w_t, ((0, w_in_pad - w_in),
                            (0, w_pad_out - w_out))).astype(cdt)          # (w_in_pad, w_pad_out)

    # Grid-invariant A matrices: drop the second pipeline buffer once it costs
    # real VMEM (they are DMA'd once regardless); tiny ones keep the default.
    a_bytes = (h_out * h_pad + w_in_pad * w_pad_out) * c_bytes
    single_buf_a = a_bytes > (512 * 1024)
    a_kwargs = dict(pipeline_mode=pl.Buffered(1)) if single_buf_a else {}
    a_buffers = 1 if single_buf_a else 2

    # ---- plane-block size B: VMEM budget + fused MXU-row target --------------
    per_plane = (2 * h_pad * w_in_pad * io_bytes          # input block, double-buffered
                 + 2 * h_out * w_pad_out * io_bytes       # output block, double-buffered
                 + h_pad * w_in_pad * c_bytes             # compute-dtype copy of x
                 + h_pad * w_pad_out * (4 + c_bytes))     # pass-1 f32 result + scratch
    fixed = a_buffers * a_bytes + h_out * w_pad_out * 4   # A matrices + one pass-2 result
    budget = int(vmem_limit_bytes * 0.70)
    b_fit = max(1, (budget - fixed) // per_plane)
    b_rows = max(1, 2048 // h_pad)                 # target ~2048 fused rows in pass 1
    b = int(min(p, b_fit, b_rows))
    if num_cores > 1 and p > 1:                    # only split the grid on multi-TC parts
        b = min(b, -(-p // num_cores))
    b = max(1, b)
    num_steps = -(-p // b)
    p_pad = num_steps * b

    # ---- layout plumbing (wrapper-side; no transposes) ------------------------
    x3 = x_nchw.reshape(p, h_in, w_in)
    x3 = jnp.pad(x3, ((0, p_pad - p), (0, h_pad - h_in), (0, w_in_pad - w_in)))
    x2d = x3.reshape(p_pad * h_pad, w_in_pad)      # merge leading dims: free reshape

    out3 = pl.pallas_call(
        _resize_kernel,
        out_shape=jax.ShapeDtypeStruct((p_pad, h_out, w_pad_out), x_nchw.dtype),
        grid_spec=pltpu.PrefetchScalarGridSpec(
            num_scalar_prefetch=0,
            grid=(num_steps,),
            in_specs=[
                pl.BlockSpec((b * h_pad, w_in_pad), lambda i: (i, 0)),
                pl.BlockSpec((w_in_pad, w_pad_out), lambda i: (0, 0), **a_kwargs),
                pl.BlockSpec((h_out, h_pad), lambda i: (0, 0), **a_kwargs),
            ],
            out_specs=pl.BlockSpec((b, h_out, w_pad_out), lambda i: (i, 0, 0)),
            scratch_shapes=[pltpu.VMEM((b * h_pad, w_pad_out), cdt)],
        ),
        compiler_params=pltpu.CompilerParams(
            dimension_semantics=("parallel",),
            vmem_limit_bytes=vmem_limit_bytes),
    )(x2d, a_w_t, a_h)

    # Drop plane/width padding and restore NCHW (contiguous slices only).
    return out3[:p, :, :w_out].reshape(n, c, h_out, w_out)


def bilinear_resize_pallas(x_nchw, scale, compute_dtype=jnp.bfloat16,
                           vmem_limit_bytes=None, num_cores=None):
    """Bilinear resize of an NCHW tensor by `scale` (PyTorch semantics)."""
    if vmem_limit_bytes is None or num_cores is None:
        d_cores, d_vmem = _tpu_defaults()
        if num_cores is None:
            num_cores = d_cores
        if vmem_limit_bytes is None:
            vmem_limit_bytes = d_vmem
    return _bilinear_resize_impl(x_nchw, float(scale), compute_dtype,
                                 int(vmem_limit_bytes), int(num_cores))


class RandomScalePallas:
    """Randomly scales an image (bilinear), mirroring the PyTorch RandomScale."""

    def __init__(self, scales, compute_dtype=jnp.bfloat16):
        # Default bf16 operands + f32 accumulation: MXU-native fast path
        # (~1e-3 rel error, fine for augmentation).  Pass jnp.float32 for the
        # exact-reference path.  Each distinct scale triggers one trace/compile
        # (static arg) -- acceptable for a short scale list.
        self.scales = scales
        self.compute_dtype = compute_dtype

    def __call__(self, x_nchw: jnp.ndarray) -> jnp.ndarray:
        scale = self.scales[random.randint(0, len(self.scales) - 1)]
        return bilinear_resize_pallas(x_nchw, float(scale),
                                      compute_dtype=self.compute_dtype)


if __name__ == "__main__":
    random.seed(0)  # deterministic scale choice

    key = jax.random.PRNGKey(0)
    x = jax.random.normal(key, (2, 4, 16, 16), dtype=jnp.float32)  # NCHW

    # Module behaviour (random scale from the list, default bf16 fast path).
    module = RandomScalePallas(scales=[0.8, 1.0, 1.2])
    out = jax.block_until_ready(module(x))
    assert out.ndim == 4 and out.shape[:2] == (2, 4)

    def dense_ref(x_, s):
        a_h = _interp_matrix(x_.shape[2], s)
        a_wt = _interp_matrix(x_.shape[3], s).T
        return jnp.einsum("oh,nchw,wv->ncov", a_h, x_, a_wt,
                          precision=jax.lax.Precision.HIGHEST)

    # Deterministic check 1: f32 compute path, downscale.
    got32 = jax.block_until_ready(
        bilinear_resize_pallas(x, 0.8, compute_dtype=jnp.float32))
    ref = dense_ref(x, 0.8)
    assert got32.shape == ref.shape, (got32.shape, ref.shape)
    err32 = float(jnp.max(jnp.abs(got32 - ref)))
    assert err32 < 5e-2, f"f32 path max abs error {err32}"

    # Deterministic check 2: default bf16 fast path, upscale.
    got_bf = jax.block_until_ready(bilinear_resize_pallas(x, 1.2))
    ref_up = dense_ref(x, 1.2)
    assert got_bf.shape == ref_up.shape, (got_bf.shape, ref_up.shape)
    err_bf = float(jnp.max(jnp.abs(got_bf - ref_up)))
    assert err_bf < 5e-2, f"bf16 path max abs error {err_bf}"

    print("KERNEL_OK")
</pallas_src>

<mosaic_0001>
module attributes {stable_mosaic.version = 11 : i64} {
  func.func private @main(%arg0: i32) attributes {dimension_semantics = [#tpu.dimension_semantics<core_parallel>], iteration_bounds = array<i64: 2>, tpu.core_type = #tpu.core_type<sc_scalar_subcore>, window_params = []} {
    return
  }
}

module attributes {stable_mosaic.version = 11 : i64} {
  func.func private @main(%arg0: i32) attributes {dimension_semantics = [#tpu.dimension_semantics<core_parallel>], iteration_bounds = array<i64: 2>, tpu.core_type = #tpu.core_type<sc_scalar_subcore>, window_params = []} {
    return
  }
}

module attributes {stable_mosaic.version = 11 : i64} {
  func.func @_resize_kernel(%arg0: i32, %arg1: memref<128x128xf32, #tpu.memory_space<vmem>>, %arg2: memref<128x128xbf16, #tpu.memory_space<vmem>>, %arg3: memref<16x16xbf16, #tpu.memory_space<vmem>>, %arg4: memref<8x16x128xf32, #tpu.memory_space<vmem>>, %arg5: memref<128x128xbf16, #tpu.memory_space<vmem>>) attributes {dimension_semantics = [#tpu.dimension_semantics<parallel>], iteration_bounds = array<i64: 1>, scalar_prefetch = 0 : i64, scratch_operands = 1 : i64, tpu.core_type = #tpu.core_type<tc>, window_params = [{transform_indices = @transform_0, window_bounds = array<i64: 128, 128>}, {pipeline_mode = #tpu.pipeline_mode<synchronous>, transform_indices = @transform_1, window_bounds = array<i64: 128, 128>}, {pipeline_mode = #tpu.pipeline_mode<synchronous>, transform_indices = @transform_2, window_bounds = array<i64: 16, 16>}, {transform_indices = @transform_3, window_bounds = array<i64: 8, 16, 128>}]} {
    %c0 = arith.constant 0 : index
    %c0_0 = arith.constant 0 : index
    %0 = vector.load %arg1[%c0, %c0_0] : memref<128x128xf32, #tpu.memory_space<vmem>>, vector<128x128xf32>
    %1 = arith.truncf %0 : vector<128x128xf32> to vector<128x128xbf16>
    %c0_1 = arith.constant 0 : index
    %c0_2 = arith.constant 0 : index
    %2 = vector.load %arg2[%c0_1, %c0_2] : memref<128x128xbf16, #tpu.memory_space<vmem>>, vector<128x128xbf16>
    %cst = arith.constant dense<0.000000e+00> : vector<128x128xf32>
    %3 = tpu.matmul %1, %2, %cst {dimension_numbers = #tpu.dot_dimension_numbers<[1], [0], [0], [1], [0, 0, 1, 1], [], []>} : vector<128x128xbf16>, vector<128x128xbf16>, vector<128x128xf32> -> vector<128x128xf32>
    %4 = arith.truncf %3 : vector<128x128xf32> to vector<128x128xbf16>
    %c0_3 = arith.constant 0 : index
    %c0_4 = arith.constant 0 : index
    %5 = vector.load %arg5[%c0_3, %c0_4] : memref<128x128xbf16, #tpu.memory_space<vmem>>, vector<128x128xbf16>
    tpu.vector_store %arg5[%c0_3, %c0_4], %4 {strides = array<i32>} : memref<128x128xbf16, #tpu.memory_space<vmem>>, vector<128x128xbf16>,
    %c0_5 = arith.constant 0 : index
    %c0_6 = arith.constant 0 : index
    %6 = vector.load %arg3[%c0_5, %c0_6] : memref<16x16xbf16, #tpu.memory_space<vmem>>, vector<16x16xbf16>
    %c0_7 = arith.constant 0 : index
    %c0_8 = arith.constant 0 : index
    %7 = vector.load %arg5[%c0_7, %c0_8] : memref<128x128xbf16, #tpu.memory_space<vmem>>, vector<16x128xbf16>
    %cst_9 = arith.constant dense<0.000000e+00> : vector<16x128xf32>
    %8 = tpu.matmul %6, %7, %cst_9 {dimension_numbers = #tpu.dot_dimension_numbers<[1], [0], [0], [1], [0, 0, 1, 1], [], []>} : vector<16x16xbf16>, vector<16x128xbf16>, vector<16x128xf32> -> vector<16x128xf32>
    %c0_10 = arith.constant 0 : index
    %c0_11 = arith.constant 0 : index
    %c0_12 = arith.constant 0 : index
    %9 = vector.load %arg4[%c0_10, %c0_11, %c0_12] : memref<8x16x128xf32, #tpu.memory_space<vmem>>, vector<1x16x128xf32>
    %10 = vector.shape_cast %9 : vector<1x16x128xf32> to vector<16x128xf32>
    %11 = vector.shape_cast %8 : vector<16x128xf32> to vector<1x16x128xf32>
    tpu.vector_store %arg4[%c0_10, %c0_11, %c0_12], %11 {strides = array<i32>} : memref<8x16x128xf32, #tpu.memory_space<vmem>>, vector<1x16x128xf32>,
    %c16 = arith.constant 16 : index
    %c0_13 = arith.constant 0 : index
    %12 = vector.load %arg5[%c16, %c0_13] : memref<128x128xbf16, #tpu.memory_space<vmem>>, vector<16x128xbf16>
    %cst_14 = arith.constant dense<0.000000e+00> : vector<16x128xf32>
    %13 = tpu.matmul %6, %12, %cst_14 {dimension_numbers = #tpu.dot_dimension_numbers<[1], [0], [0], [1], [0, 0, 1, 1], [], []>} : vector<16x16xbf16>, vector<16x128xbf16>, vector<16x128xf32> -> vector<16x128xf32>
    %c1 = arith.constant 1 : index
    %c0_15 = arith.constant 0 : index
    %c0_16 = arith.constant 0 : index
    %14 = vector.load %arg4[%c1, %c0_15, %c0_16] : memref<8x16x128xf32, #tpu.memory_space<vmem>>, vector<1x16x128xf32>
    %15 = vector.shape_cast %14 : vector<1x16x128xf32> to vector<16x128xf32>
    %16 = vector.shape_cast %13 : vector<16x128xf32> to vector<1x16x128xf32>
    tpu.vector_store %arg4[%c1, %c0_15, %c0_16], %16 {strides = array<i32>} : memref<8x16x128xf32, #tpu.memory_space<vmem>>, vector<1x16x128xf32>,
    %c32 = arith.constant 32 : index
    %c0_17 = arith.constant 0 : index
    %17 = vector.load %arg5[%c32, %c0_17] : memref<128x128xbf16, #tpu.memory_space<vmem>>, vector<16x128xbf16>
    %cst_18 = arith.constant dense<0.000000e+00> : vector<16x128xf32>
    %18 = tpu.matmul %6, %17, %cst_18 {dimension_numbers = #tpu.dot_dimension_numbers<[1], [0], [0], [1], [0, 0, 1, 1], [], []>} : vector<16x16xbf16>, vector<16x128xbf16>, vector<16x128xf32> -> vector<16x128xf32>
    %c2 = arith.constant 2 : index
    %c0_19 = arith.constant 0 : index
    %c0_20 = arith.constant 0 : index
    %19 = vector.load %arg4[%c2, %c0_19, %c0_20] : memref<8x16x128xf32, #tpu.memory_space<vmem>>, vector<1x16x128xf32>
    %20 = vector.shape_cast %19 : vector<1x16x128xf32> to vector<16x128xf32>
    %21 = vector.shape_cast %18 : vector<16x128xf32> to vector<1x16x128xf32>
    tpu.vector_store %arg4[%c2, %c0_19, %c0_20], %21 {strides = array<i32>} : memref<8x16x128xf32, #tpu.memory_space<vmem>>, vector<1x16x128xf32>,
    %c48 = arith.constant 48 : index
    %c0_21 = arith.constant 0 : index
    %22 = vector.load %arg5[%c48, %c0_21] : memref<128x128xbf16, #tpu.memory_space<vmem>>, vector<16x128xbf16>
    %cst_22 = arith.constant dense<0.000000e+00> : vector<16x128xf32>
    %23 = tpu.matmul %6, %22, %cst_22 {dimension_numbers = #tpu.dot_dimension_numbers<[1], [0], [0], [1], [0, 0, 1, 1], [], []>} : vector<16x16xbf16>, vector<16x128xbf16>, vector<16x128xf32> -> vector<16x128xf32>
    %c3 = arith.constant 3 : index
    %c0_23 = arith.constant 0 : index
    %c0_24 = arith.constant 0 : index
    %24 = vector.load %arg4[%c3, %c0_23, %c0_24] : memref<8x16x128xf32, #tpu.memory_space<vmem>>, vector<1x16x128xf32>
    %25 = vector.shape_cast %24 : vector<1x16x128xf32> to vector<16x128xf32>
    %26 = vector.shape_cast %23 : vector<16x128xf32> to vector<1x16x128xf32>
    tpu.vector_store %arg4[%c3, %c0_23, %c0_24], %26 {strides = array<i32>} : memref<8x16x128xf32, #tpu.memory_space<vmem>>, vector<1x16x128xf32>,
    %c64 = arith.constant 64 : index
    %c0_25 = arith.constant 0 : index
    %27 = vector.load %arg5[%c64, %c0_25] : memref<128x128xbf16, #tpu.memory_space<vmem>>, vector<16x128xbf16>
    %cst_26 = arith.constant dense<0.000000e+00> : vector<16x128xf32>
    %28 = tpu.matmul %6, %27, %cst_26 {dimension_numbers = #tpu.dot_dimension_numbers<[1], [0], [0], [1], [0, 0, 1, 1], [], []>} : vector<16x16xbf16>, vector<16x128xbf16>, vector<16x128xf32> -> vector<16x128xf32>
    %c4 = arith.constant 4 : index
    %c0_27 = arith.constant 0 : index
    %c0_28 = arith.constant 0 : index
    %29 = vector.load %arg4[%c4, %c0_27, %c0_28] : memref<8x16x128xf32, #tpu.memory_space<vmem>>, vector<1x16x128xf32>
    %30 = vector.shape_cast %29 : vector<1x16x128xf32> to vector<16x128xf32>
    %31 = vector.shape_cast %28 : vector<16x128xf32> to vector<1x16x128xf32>
    tpu.vector_store %arg4[%c4, %c0_27, %c0_28], %31 {strides = array<i32>} : memref<8x16x128xf32, #tpu.memory_space<vmem>>, vector<1x16x128xf32>,
    %c80 = arith.constant 80 : index
    %c0_29 = arith.constant 0 : index
    %32 = vector.load %arg5[%c80, %c0_29] : memref<128x128xbf16, #tpu.memory_space<vmem>>, vector<16x128xbf16>
    %cst_30 = arith.constant dense<0.000000e+00> : vector<16x128xf32>
    %33 = tpu.matmul %6, %32, %cst_30 {dimension_numbers = #tpu.dot_dimension_numbers<[1], [0], [0], [1], [0, 0, 1, 1], [], []>} : vector<16x16xbf16>, vector<16x128xbf16>, vector<16x128xf32> -> vector<16x128xf32>
    %c5 = arith.constant 5 : index
    %c0_31 = arith.constant 0 : index
    %c0_32 = arith.constant 0 : index
    %34 = vector.load %arg4[%c5, %c0_31, %c0_32] : memref<8x16x128xf32, #tpu.memory_space<vmem>>, vector<1x16x128xf32>
    %35 = vector.shape_cast %34 : vector<1x16x128xf32> to vector<16x128xf32>
    %36 = vector.shape_cast %33 : vector<16x128xf32> to vector<1x16x128xf32>
    tpu.vector_store %arg4[%c5, %c0_31, %c0_32], %36 {strides = array<i32>} : memref<8x16x128xf32, #tpu.memory_space<vmem>>, vector<1x16x128xf32>,
    %c96 = arith.constant 96 : index
    %c0_33 = arith.constant 0 : index
    %37 = vector.load %arg5[%c96, %c0_33] : memref<128x128xbf16, #tpu.memory_space<vmem>>, vector<16x128xbf16>
    %cst_34 = arith.constant dense<0.000000e+00> : vector<16x128xf32>
    %38 = tpu.matmul %6, %37, %cst_34 {dimension_numbers = #tpu.dot_dimension_numbers<[1], [0], [0], [1], [0, 0, 1, 1], [], []>} : vector<16x16xbf16>, vector<16x128xbf16>, vector<16x128xf32> -> vector<16x128xf32>
    %c6 = arith.constant 6 : index
    %c0_35 = arith.constant 0 : index
    %c0_36 = arith.constant 0 : index
    %39 = vector.load %arg4[%c6, %c0_35, %c0_36] : memref<8x16x128xf32, #tpu.memory_space<vmem>>, vector<1x16x128xf32>
    %40 = vector.shape_cast %39 : vector<1x16x128xf32> to vector<16x128xf32>
    %41 = vector.shape_cast %38 : vector<16x128xf32> to vector<1x16x128xf32>
    tpu.vector_store %arg4[%c6, %c0_35, %c0_36], %41 {strides = array<i32>} : memref<8x16x128xf32, #tpu.memory_space<vmem>>, vector<1x16x128xf32>,
    %c112 = arith.constant 112 : index
    %c0_37 = arith.constant 0 : index
    %42 = vector.load %arg5[%c112, %c0_37] : memref<128x128xbf16, #tpu.memory_space<vmem>>, vector<16x128xbf16>
    %cst_38 = arith.constant dense<0.000000e+00> : vector<16x128xf32>
    %43 = tpu.matmul %6, %42, %cst_38 {dimension_numbers = #tpu.dot_dimension_numbers<[1], [0], [0], [1], [0, 0, 1, 1], [], []>} : vector<16x16xbf16>, vector<16x128xbf16>, vector<16x128xf32> -> vector<16x128xf32>
    %c7 = arith.constant 7 : index
    %c0_39 = arith.constant 0 : index
    %c0_40 = arith.constant 0 : index
    %44 = vector.load %arg4[%c7, %c0_39, %c0_40] : memref<8x16x128xf32, #tpu.memory_space<vmem>>, vector<1x16x128xf32>
    %45 = vector.shape_cast %44 : vector<1x16x128xf32> to vector<16x128xf32>
    %46 = vector.shape_cast %43 : vector<16x128xf32> to vector<1x16x128xf32>
    tpu.vector_store %arg4[%c7, %c0_39, %c0_40], %46 {strides = array<i32>} : memref<8x16x128xf32, #tpu.memory_space<vmem>>, vector<1x16x128xf32>,
    return
  }
  func.func @transform_0(%arg0: i32) -> (i32, i32) {
    %c0_i32 = arith.constant 0 : i32
    %c0_i32_0 = arith.constant 0 : i32
    return %arg0, %c0_i32 : i32, i32
  }
  func.func @transform_1(%arg0: i32) -> (i32, i32) {
    %c0_i32 = arith.constant 0 : i32
    %c0_i32_0 = arith.constant 0 : i32
    %c0_i32_1 = arith.constant 0 : i32
    return %c0_i32, %c0_i32_0 : i32, i32
  }
  func.func @transform_2(%arg0: i32) -> (i32, i32) {
    %c0_i32 = arith.constant 0 : i32
    %c0_i32_0 = arith.constant 0 : i32
    %c0_i32_1 = arith.constant 0 : i32
    return %c0_i32, %c0_i32_0 : i32, i32
  }
  func.func @transform_3(%arg0: i32) -> (i32, i32, i32) {
    %c0_i32 = arith.constant 0 : i32
    %c0_i32_0 = arith.constant 0 : i32
    %c0_i32_1 = arith.constant 0 : i32
    return %arg0, %c0_i32, %c0_i32_0 : i32, i32, i32
  }
}

</mosaic_0001>

<llo_original>
// kernel: _bilinear_resize_impl.1
$region0: #{_bilinear_resize_impl.1}
  #allocation0 [shape = 'u32[]', space=smem, size = 0x4, offset = 0x4, fixed_abs, tag = 'smem constant byte address 0x4 - core index']
  #allocation1 [shape = 'u32[144,128]{1,0:T(1,128)}', space=vmem, size = 0x12000, scoped, tag = 'internal scratch']
  #allocation2 [shape = 'bf16[128,128]{1,0:T(16,128)(2,1)}', space=vmem, size = 0x8000, scoped, tag = 'scratch operand']
  %s0 = inlined_call_operand.hbm [shape: f32[128,128], index: 0, kind: input, shape index: {}]
  %s1 = inlined_call_operand.hbm [shape: bf16[128,128], index: 1, kind: input, shape index: {}]
  %s2 = inlined_call_operand.hbm [shape: bf16[16,16], index: 2, kind: input, shape index: {}]
  %s3 = inlined_call_operand.hbm [shape: f32[8,16,128], index: 3, kind: output, shape index: {}]
  %s4 = sld [smem:[#allocation0]]
  $region34: #{_bilinear_resize_impl.1} parent=0
    _
  %s6 = ssub.s32 1, %s4
  %s7 = scalar_select 0, %s6, %s4
  $region1: #{_bilinear_resize_impl.1} parent=0
    #allocation3 [shape = 'u8[65536]{0}', space=vmem, size = 0x10000, scoped, tag = 'input window, operand 0, single buffered']
    #allocation4 [shape = 's32[1]{0}', space=sflag, size = 0x4, scoped, tag = 'scoped memory for _bilinear_resize_impl.1']
    #allocation5 [shape = 's32[1]{0}', space=sflag, size = 0x4, scoped, tag = 'scoped memory for _bilinear_resize_impl.1']
    #allocation6 [shape = 'u8[32768]{0}', space=vmem, size = 0x8000, scoped, tag = 'input window, operand 1, single buffered']
    #allocation7 [shape = 's32[1]{0}', space=sflag, size = 0x4, scoped, tag = 'scoped memory for _bilinear_resize_impl.1']
    #allocation8 [shape = 'u8[4096]{0}', space=vmem, size = 0x1000, scoped, tag = 'input window, operand 2, single buffered']
    #allocation9 [shape = 'u8[65536]{0}', space=vmem, size = 0x10000, scoped, tag = 'output window, operand 0, single buffered']
    %8 = vsyncpa [#allocation4], 0
    %9 = vsyncpa [#allocation7], 0
    %10 = vsyncpa [#allocation5], 0
    // Predicated region
    $region2: #{_bilinear_resize_impl.1} parent=1 // pred_check
      _
    $region3: #{_bilinear_resize_impl.1} parent=1 // pred_check_branch
      %12 = sbr.rel (0) target = $region5
    $region4: #{_bilinear_resize_impl.1} parent=1 // pred_region
      %s14 = ssub.s32 2048, 2048
      %15 = vsyncadd [#allocation4], %s14
      %s16 = sshll.u32 [#allocation3], 4
      %s17 = int_to_ptr.vmem [resolvable:$true] %s16
      %22 = dma.hbm_to_vmem [thread:$0]  %s0, 2048, %s17, [#allocation4], 128, 128, 8
    $region5: #{_bilinear_resize_impl.1} parent=1 // pred_fallthru
      _
    // Predicated region
    $region6: #{_bilinear_resize_impl.1} parent=1 // pred_check
      _
    $region7: #{_bilinear_resize_impl.1} parent=1 // pred_check_branch
      %24 = sbr.rel (0) target = $region9
    $region8: #{_bilinear_resize_impl.1} parent=1 // pred_region
      %s26 = ssub.s32 1024, 1024
      %27 = vsyncadd [#allocation7], %s26
      %s28 = sshll.u32 [#allocation6], 4
      %s29 = int_to_ptr.vmem [resolvable:$true] %s28
      %34 = dma.hbm_to_vmem [thread:$0]  %s1, 1024, %s29, [#allocation7], 64, 64, 4
    $region9: #{_bilinear_resize_impl.1} parent=1 // pred_fallthru
      _
    // Predicated region
    $region10: #{_bilinear_resize_impl.1} parent=1 // pred_check
      _
    $region11: #{_bilinear_resize_impl.1} parent=1 // pred_check_branch
      %36 = sbr.rel (0) target = $region13
    $region12: #{_bilinear_resize_impl.1} parent=1 // pred_region
      %s38 = ssub.s32 128, 128
      %39 = vsyncadd [#allocation7], %s38
      %s40 = sshll.u32 [#allocation8], 4
      %s41 = int_to_ptr.vmem [resolvable:$true] %s40
      %46 = dma.hbm_to_vmem [thread:$0]  %s2, 128, %s41, [#allocation7], 64, 64, 4
    $region13: #{_bilinear_resize_impl.1} parent=1 // pred_fallthru
      _
    // Predicated region
    $region14: #{_bilinear_resize_impl.1} parent=1 // pred_check
      _
    $region15: #{_bilinear_resize_impl.1} parent=1 // pred_check_branch
      %48 = sbr.rel (0) target = $region17
    $region16: #{_bilinear_resize_impl.1} parent=1 // pred_region
      %49 = dma.done [#allocation4], 2048
    $region17: #{_bilinear_resize_impl.1} parent=1 // pred_fallthru
      _
    // Predicated region
    $region18: #{_bilinear_resize_impl.1} parent=1 // pred_check
      _
    $region19: #{_bilinear_resize_impl.1} parent=1 // pred_check_branch
      %51 = sbr.rel (0) target = $region21
    $region20: #{_bilinear_resize_impl.1} parent=1 // pred_region
      %52 = dma.done [#allocation7], 1024
    $region21: #{_bilinear_resize_impl.1} parent=1 // pred_fallthru
      _
    // Predicated region
    $region22: #{_bilinear_resize_impl.1} parent=1 // pred_check
      _
    $region23: #{_bilinear_resize_impl.1} parent=1 // pred_check_branch
      %54 = sbr.rel (0) target = $region25
    $region24: #{_bilinear_resize_impl.1} parent=1 // pred_region
      %55 = dma.done [#allocation7], 128
    $region25: #{_bilinear_resize_impl.1} parent=1 // pred_fallthru
      _
    %v57 = vld [vmem:[#allocation3] sm:$0xff]
    %v58 = vld [vmem:[#allocation3 + $0x8] sm:$0xff]
    %v59 = vld [vmem:[#allocation3 + $0x10] sm:$0xff]
    %v60 = vld [vmem:[#allocation3 + $0x18] sm:$0xff]
    %v61 = vld [vmem:[#allocation3 + $0x20] sm:$0xff]
    %v62 = vld [vmem:[#allocation3 + $0x28] sm:$0xff]
    %v63 = vld [vmem:[#allocation3 + $0x30] sm:$0xff]
    %v64 = vld [vmem:[#allocation3 + $0x38] sm:$0xff]
    %v65 = vld [vmem:[#allocation3 + $0x40] sm:$0xff]
    %v66 = vld [vmem:[#allocation3 + $0x48] sm:$0xff]
    %v67 = vld [vmem:[#allocation3 + $0x50] sm:$0xff]
    %v68 = vld [vmem:[#allocation3 + $0x58] sm:$0xff]
    %v69 = vld [vmem:[#allocation3 + $0x60] sm:$0xff]
    %v70 = vld [vmem:[#allocation3 + $0x68] sm:$0xff]
    %v71 = vld [vmem:[#allocation3 + $0x70] sm:$0xff]
    %v72 = vld [vmem:[#allocation3 + $0x78] sm:$0xff]
    %v73 = vpack.c.bf16 %v58, %v57
    %v74 = vpack.c.bf16 %v60, %v59
    %v75 = vpack.c.bf16 %v62, %v61
    %v76 = vpack.c.bf16 %v64, %v63
    %v77 = vpack.c.bf16 %v66, %v65
    %v78 = vpack.c.bf16 %v68, %v67
    %v79 = vpack.c.bf16 %v70, %v69
    %v80 = vpack.c.bf16 %v72, %v71
    %v81 = vld [vmem:[#allocation6] sm:$0xf]
    %v82 = vld [vmem:[#allocation6 + $0x4] sm:$0xf]
    %v83 = vld [vmem:[#allocation6 + $0x8] sm:$0xf]
    %v84 = vld [vmem:[#allocation6 + $0xc] sm:$0xf]
    %v85 = vld [vmem:[#allocation6 + $0x10] sm:$0xf]
    %v86 = vld [vmem:[#allocation6 + $0x14] sm:$0xf]
    %v87 = vld [vmem:[#allocation6 + $0x18] sm:$0xf]
    %v88 = vld [vmem:[#allocation6 + $0x1c] sm:$0xf]
    %v89 = vld [vmem:[#allocation6 + $0x20] sm:$0xf]
    %v90 = vld [vmem:[#allocation6 + $0x24] sm:$0xf]
    %v91 = vld [vmem:[#allocation6 + $0x28] sm:$0xf]
    %v92 = vld [vmem:[#allocation6 + $0x2c] sm:$0xf]
    %v93 = vld [vmem:[#allocation6 + $0x30] sm:$0xf]
    %v94 = vld [vmem:[#allocation6 + $0x34] sm:$0xf]
    %v95 = vld [vmem:[#allocation6 + $0x38] sm:$0xf]
    %v96 = vld [vmem:[#allocation6 + $0x3c] sm:$0xf]
    %v113 = vunpack.c.l.b16 %v81
    %v114 = vunpack.c.l.b16 %v82
    %v115 = vunpack.c.l.b16 %v83
    %v116 = vunpack.c.l.b16 %v84
    %v117 = vunpack.c.l.b16 %v85
    %v118 = vunpack.c.l.b16 %v86
    %v119 = vunpack.c.l.b16 %v87
    %v120 = vunpack.c.l.b16 %v88
    %v121 = vunpack.c.l.b16 %v89
    %v122 = vunpack.c.l.b16 %v90
    %v123 = vunpack.c.l.b16 %v91
    %v124 = vunpack.c.l.b16 %v92
    %v125 = vunpack.c.l.b16 %v93
    %v126 = vunpack.c.l.b16 %v94
    %v127 = vunpack.c.l.b16 %v95
    %v128 = vunpack.c.l.b16 %v96
    %v129 = vpack.c.b16 %v114, %v113
    %v130 = vpack.c.b16 %v116, %v115
    %v131 = vpack.c.b16 %v118, %v117
    %v132 = vpack.c.b16 %v120, %v119
    %v133 = vpack.c.b16 %v122, %v121
    %v134 = vpack.c.b16 %v124, %v123
    %v135 = vpack.c.b16 %v126, %v125
    %v136 = vpack.c.b16 %v128, %v127
    %145 = vmatprep.subr.bf16.mxu0 0
    %146 = vmatpush1.bf16.msra.mxu0 %v129
    %147 = vmatprep.subr.bf16.mxu0 0
    %148 = vmatpush1.bf16.msra.mxu0 %v130
    %149 = vmatprep.subr.bf16.mxu0 0
    %150 = vmatpush1.bf16.msra.mxu0 %v131
    %151 = vmatprep.subr.bf16.mxu0 0
    %152 = vmatpush1.bf16.msra.mxu0 %v132
    %153 = vmatprep.subr.bf16.mxu0 0
    %154 = vmatpush1.bf16.msra.mxu0 %v133
    %155 = vmatprep.subr.bf16.mxu0 0
    %156 = vmatpush1.bf16.msra.mxu0 %v134
    %157 = vmatprep.subr.bf16.mxu0 0
    %158 = vmatpush1.bf16.msra.mxu0 %v135
    %159 = vmatprep.subr.bf16.mxu0 0
    %160 = vmatpush1.bf16.msra.mxu0 %v136
    %161 = vmatprep.subr.bf16.mxu0 0
    %162 = vmatpush1.bf16.msra.mxu0 0
    %163 = vmatprep.subr.bf16.mxu0 0
    %164 = vmatpush1.bf16.msra.mxu0 0
    %165 = vmatprep.subr.bf16.mxu0 0
    %166 = vmatpush1.bf16.msra.mxu0 0
    %167 = vmatprep.subr.bf16.mxu0 0
    %168 = vmatpush1.bf16.msra.mxu0 0
    %169 = vmatprep.subr.bf16.mxu0 0
    %170 = vmatpush1.bf16.msra.mxu0 0
    %171 = vmatprep.subr.bf16.mxu0 0
    %172 = vmatpush1.bf16.msra.mxu0 0
    %173 = vmatprep.subr.bf16.mxu0 0
    %174 = vmatpush1.bf16.msra.mxu0 0
    %175 = vmatprep.subr.bf16.mxu0 0
    %176 = vmatpush1.bf16.msra.mxu0 0
    %177 = vmatprep.mubr.bf16.mxu0 0
    %178 = vmatmul.mubr.bf16.gmra.mrb[0].mxu0 %v73
    %v179 = vpop.f32.mrb[0].mxu0
    %v180 = vadd.f32 0.0, %v179
    %v181 = vpop.f32.mrb[0].mxu0
    %v182 = vpop.f32.mrb[0].mxu0
    %v183 = vadd.f32 0.0, %v182
    %v184 = vpop.f32.mrb[0].mxu0
    %185 = vmatprep.mubr.bf16.mxu0 0
    %186 = vmatmul.mubr.bf16.gmra.mrb[0].mxu0 %v74
    %v187 = vpop.f32.mrb[0].mxu0
    %v188 = vadd.f32 0.0, %v187
    %v189 = vpop.f32.mrb[0].mxu0
    %v190 = vpop.f32.mrb[0].mxu0
    %v191 = vadd.f32 0.0, %v190
    %v192 = vpop.f32.mrb[0].mxu0
    %193 = vmatprep.mubr.bf16.mxu0 0
    %194 = vmatmul.mubr.bf16.gmra.mrb[0].mxu0 %v75
    %v195 = vpop.f32.mrb[0].mxu0
    %v196 = vadd.f32 0.0, %v195
    %v197 = vpop.f32.mrb[0].mxu0
    %v198 = vpop.f32.mrb[0].mxu0
    %v199 = vadd.f32 0.0, %v198
    %v200 = vpop.f32.mrb[0].mxu0
    %201 = vmatprep.mubr.bf16.mxu0 0
    %202 = vmatmul.mubr.bf16.gmra.mrb[0].mxu0 %v76
    %v203 = vpop.f32.mrb[0].mxu0
    %v204 = vadd.f32 0.0, %v203
    %v205 = vpop.f32.mrb[0].mxu0
    %v206 = vpop.f32.mrb[0].mxu0
    %v207 = vadd.f32 0.0, %v206
    %v208 = vpop.f32.mrb[0].mxu0
    %209 = vmatprep.mubr.bf16.mxu0 0
    %210 = vmatmul.mubr.bf16.gmra.mrb[0].mxu0 %v77
    %v211 = vpop.f32.mrb[0].mxu0
    %v212 = vadd.f32 0.0, %v211
    %v213 = vpop.f32.mrb[0].mxu0
    %v214 = vpop.f32.mrb[0].mxu0
    %v215 = vadd.f32 0.0, %v214
    %v216 = vpop.f32.mrb[0].mxu0
    %217 = vmatprep.mubr.bf16.mxu0 0
    %218 = vmatmul.mubr.bf16.gmra.mrb[0].mxu0 %v78
    %v219 = vpop.f32.mrb[0].mxu0
    %v220 = vadd.f32 0.0, %v219
    %v221 = vpop.f32.mrb[0].mxu0
    %v222 = vpop.f32.mrb[0].mxu0
    %v223 = vadd.f32 0.0, %v222
    %v224 = vpop.f32.mrb[0].mxu0
    %225 = vmatprep.mubr.bf16.mxu0 0
    %226 = vmatmul.mubr.bf16.gmra.mrb[0].mxu0 %v79
    %v227 = vpop.f32.mrb[0].mxu0
    %v228 = vadd.f32 0.0, %v227
    %v229 = vpop.f32.mrb[0].mxu0
    %v230 = vpop.f32.mrb[0].mxu0
    %v231 = vadd.f32 0.0, %v230
    %v232 = vpop.f32.mrb[0].mxu0
    %233 = vmatprep.mubr.bf16.mxu0 0
    %234 = vmatmul.mubr.bf16.gmra.mrb[0].mxu0 %v80
    %v235 = vpop.f32.mrb[0].mxu0
    %v236 = vadd.f32 0.0, %v235
    %v237 = vpop.f32.mrb[0].mxu0
    %v238 = vpop.f32.mrb[0].mxu0
    %v239 = vadd.f32 0.0, %v238
    %v240 = vpop.f32.mrb[0].mxu0
    %241 = vdwg.mxu0
    %v242 = vpack.c.bf16 %v183, %v180
    %v243 = vpack.c.bf16 %v191, %v188
    %v244 = vpack.c.bf16 %v199, %v196
    %v245 = vpack.c.bf16 %v207, %v204
    %v246 = vpack.c.bf16 %v215, %v212
    %v247 = vpack.c.bf16 %v223, %v220
    %v248 = vpack.c.bf16 %v231, %v228
    %v249 = vpack.c.bf16 %v239, %v236
    %250 = vst [vmem:[#allocation2] sm:$0xff] %v242
    %251 = vst [vmem:[#allocation2 + $0x8] sm:$0xff] %v243
    %252 = vst [vmem:[#allocation2 + $0x10] sm:$0xff] %v244
    %253 = vst [vmem:[#allocation2 + $0x18] sm:$0xff] %v245
    %254 = vst [vmem:[#allocation2 + $0x20] sm:$0xff] %v246
    %255 = vst [vmem:[#allocation2 + $0x28] sm:$0xff] %v247
    %256 = vst [vmem:[#allocation2 + $0x30] sm:$0xff] %v248
    %257 = vst [vmem:[#allocation2 + $0x38] sm:$0xff] %v249
    %v258 = vld [vmem:[#allocation8] sm:$0xf]
    %v259 = vld [vmem:[#allocation8 + $0x4] sm:$0xf]
    %v260 = vld [vmem:[#allocation2] sm:$0xff]
    %v263 = vunpack.c.l.b16 %v258
    %v264 = vunpack.c.l.b16 %v259
    %v265 = vpack.c.b16 %v264, %v263
    %vm266 = vcmask 130048
    %v268 = vsel %vm266, %v265, 0
    %270 = vmatprep.subr.bf16.mxu0 0
    %271 = vmatpush1.bf16.msra.mxu0 %v260
    %272 = vmatprep.subr.bf16.mxu0 0
    %273 = vmatpush1.bf16.msra.mxu0 0
    %274 = vmatprep.subr.bf16.mxu0 0
    %275 = vmatpush1.bf16.msra.mxu0 0
    %276 = vmatprep.subr.bf16.mxu0 0
    %277 = vmatpush1.bf16.msra.mxu0 0
    %278 = vmatprep.subr.bf16.mxu0 0
    %279 = vmatpush1.bf16.msra.mxu0 0
    %280 = vmatprep.subr.bf16.mxu0 0
    %281 = vmatpush1.bf16.msra.mxu0 0
    %282 = vmatprep.subr.bf16.mxu0 0
    %283 = vmatpush1.bf16.msra.mxu0 0
    %284 = vmatprep.subr.bf16.mxu0 0
    %285 = vmatpush1.bf16.msra.mxu0 0
    %286 = vmatprep.subr.bf16.mxu0 0
    %287 = vmatpush1.bf16.msra.mxu0 0
    %288 = vmatprep.subr.bf16.mxu0 0
    %289 = vmatpush1.bf16.msra.mxu0 0
    %290 = vmatprep.subr.bf16.mxu0 0
    %291 = vmatpush1.bf16.msra.mxu0 0
    %292 = vmatprep.subr.bf16.mxu0 0
    %293 = vmatpush1.bf16.msra.mxu0 0
    %294 = vmatprep.subr.bf16.mxu0 0
    %295 = vmatpush1.bf16.msra.mxu0 0
    %296 = vmatprep.subr.bf16.mxu0 0
    %297 = vmatpush1.bf16.msra.mxu0 0
    %298 = vmatprep.subr.bf16.mxu0 0
    %299 = vmatpush1.bf16.msra.mxu0 0
    %300 = vmatprep.subr.bf16.mxu0 0
    %301 = vmatpush1.bf16.msra.mxu0 0
    %302 = vmatprep.mubr.bf16.mxu0 0
    %303 = vmatmul.mubr.bf16.gmra.mrb[0].mxu0 %v268
    %v304 = vpop.f32.mrb[0].mxu0
    %v305 = vadd.f32 0.0, %v304
    %v306 = vpop.f32.mrb[0].mxu0
    %v307 = vpop.f32.mrb[0].mxu0
    %v308 = vadd.f32 0.0, %v307
    %v309 = vpop.f32.mrb[0].mxu0
    %310 = vdwg.mxu0
    %311 = vst [vmem:[#allocation9] sm:$0xff] %v305
    %312 = vst [vmem:[#allocation9 + $0x8] sm:$0xff] %v308
    %v313 = vld [vmem:[#allocation2 + $0x8] sm:$0xff]
    %314 = vmatprep.subr.bf16.mxu0 0
    %315 = vmatpush1.bf16.msra.mxu0 %v313
    %316 = vmatprep.subr.bf16.mxu0 0
    %317 = vmatpush1.bf16.msra.mxu0 0
    %318 = vmatprep.subr.bf16.mxu0 0
    %319 = vmatpush1.bf16.msra.mxu0 0
    %320 = vmatprep.subr.bf16.mxu0 0
    %321 = vmatpush1.bf16.msra.mxu0 0
    %322 = vmatprep.subr.bf16.mxu0 0
    %323 = vmatpush1.bf16.msra.mxu0 0
    %324 = vmatprep.subr.bf16.mxu0 0
    %325 = vmatpush1.bf16.msra.mxu0 0
    %326 = vmatprep.subr.bf16.mxu0 0
    %327 = vmatpush1.bf16.msra.mxu0 0
    %328 = vmatprep.subr.bf16.mxu0 0
    %329 = vmatpush1.bf16.msra.mxu0 0
    %330 = vmatprep.subr.bf16.mxu0 0
    %331 = vmatpush1.bf16.msra.mxu0 0
    %332 = vmatprep.subr.bf16.mxu0 0
    %333 = vmatpush1.bf16.msra.mxu0 0
    %334 = vmatprep.subr.bf16.mxu0 0
    %335 = vmatpush1.bf16.msra.mxu0 0
    %336 = vmatprep.subr.bf16.mxu0 0
    %337 = vmatpush1.bf16.msra.mxu0 0
    %338 = vmatprep.subr.bf16.mxu0 0
    %339 = vmatpush1.bf16.msra.mxu0 0
    %340 = vmatprep.subr.bf16.mxu0 0
    %341 = vmatpush1.bf16.msra.mxu0 0
    %342 = vmatprep.subr.bf16.mxu0 0
    %343 = vmatpush1.bf16.msra.mxu0 0
    %344 = vmatprep.subr.bf16.mxu0 0
    %345 = vmatpush1.bf16.msra.mxu0 0
    %346 = vmatprep.mubr.bf16.mxu0 0
    %347 = vmatmul.mubr.bf16.gmra.mrb[0].mxu0 %v268
    %v348 = vpop.f32.mrb[0].mxu0
    %v349 = vadd.f32 0.0, %v348
    %v350 = vpop.f32.mrb[0].mxu0
    %v351 = vpop.f32.mrb[0].mxu0
    %v352 = vadd.f32 0.0, %v351
    %v353 = vpop.f32.mrb[0].mxu0
    %354 = vdwg.mxu0
    %s355 = scalar_lea.vmem [#allocation9], 16
    %356 = vst [vmem:[%s355] sm:$0xff] %v349
    %357 = vst [vmem:[%s355 + $0x8] sm:$0xff] %v352
    %v358 = vld [vmem:[#allocation2 + $0x10] sm:$0xff]
    %359 = vmatprep.subr.bf16.mxu0 0
    %360 = vmatpush1.bf16.msra.mxu0 %v358
    %361 = vmatprep.subr.bf16.mxu0 0
    %362 = vmatpush1.bf16.msra.mxu0 0
    %363 = vmatprep.subr.bf16.mxu0 0
    %364 = vmatpush1.bf16.msra.mxu0 0
    %365 = vmatprep.subr.bf16.mxu0 0
    %366 = vmatpush1.bf16.msra.mxu0 0
    %367 = vmatprep.subr.bf16.mxu0 0
    %368 = vmatpush1.bf16.msra.mxu0 0
    %369 = vmatprep.subr.bf16.mxu0 0
    %370 = vmatpush1.bf16.msra.mxu0 0
    %371 = vmatprep.subr.bf16.mxu0 0
    %372 = vmatpush1.bf16.msra.mxu0 0
    %373 = vmatprep.subr.bf16.mxu0 0
    %374 = vmatpush1.bf16.msra.mxu0 0
    %375 = vmatprep.subr.bf16.mxu0 0
    %376 = vmatpush1.bf16.msra.mxu0 0
    %377 = vmatprep.subr.bf16.mxu0 0
    %378 = vmatpush1.bf16.msra.mxu0 0
    %379 = vmatprep.subr.bf16.mxu0 0
    %380 = vmatpush1.bf16.msra.mxu0 0
    %381 = vmatprep.subr.bf16.mxu0 0
    %382 = vmatpush1.bf16.msra.mxu0 0
    %383 = vmatprep.subr.bf16.mxu0 0
    %384 = vmatpush1.bf16.msra.mxu0 0
    %385 = vmatprep.subr.bf16.mxu0 0
    %386 = vmatpush1.bf16.msra.mxu0 0
    %387 = vmatprep.subr.bf16.mxu0 0
    %388 = vmatpush1.bf16.msra.mxu0 0
    %389 = vmatprep.subr.bf16.mxu0 0
    %390 = vmatpush1.bf16.msra.mxu0 0
    %391 = vmatprep.mubr.bf16.mxu0 0
    %392 = vmatmul.mubr.bf16.gmra.mrb[0].mxu0 %v268
    %v393 = vpop.f32.mrb[0].mxu0
    %v394 = vadd.f32 0.0, %v393
    %v395 = vpop.f32.mrb[0].mxu0
    %v396 = vpop.f32.mrb[0].mxu0
    %v397 = vadd.f32 0.0, %v396
    %v398 = vpop.f32.mrb[0].mxu0
    %399 = vdwg.mxu0
    %s400 = scalar_lea.vmem [#allocation9], 32
    %401 = vst [vmem:[%s400] sm:$0xff] %v394
    %402 = vst [vmem:[%s400 + $0x8] sm:$0xff] %v397
    %v403 = vld [vmem:[#allocation2 + $0x18] sm:$0xff]
    %404 = vmatprep.subr.bf16.mxu0 0
    %405 = vmatpush1.bf16.msra.mxu0 %v403
    %406 = vmatprep.subr.bf16.mxu0 0
    %407 = vmatpush1.bf16.msra.mxu0 0
    %408 = vmatprep.subr.bf16.mxu0 0
    %409 = vmatpush1.bf16.msra.mxu0 0
    %410 = vmatprep.subr.bf16.mxu0 0
    %411 = vmatpush1.bf16.msra.mxu0 0
    %412 = vmatprep.subr.bf16.mxu0 0
    %413 = vmatpush1.bf16.msra.mxu0 0
    %414 = vmatprep.subr.bf16.mxu0 0
    %415 = vmatpush1.bf16.msra.mxu0 0
    %416 = vmatprep.subr.bf16.mxu0 0
    %417 = vmatpush1.bf16.msra.mxu0 0
    %418 = vmatprep.subr.bf16.mxu0 0
    %419 = vmatpush1.bf16.msra.mxu0 0
    %420 = vmatprep.subr.bf16.mxu0 0
    %421 = vmatpush1.bf16.msra.mxu0 0
    %422 = vmatprep.subr.bf16.mxu0 0
    %423 = vmatpush1.bf16.msra.mxu0 0
    %424 = vmatprep.subr.bf16.mxu0 0
    %425 = vmatpush1.bf16.msra.mxu0 0
    %426 = vmatprep.subr.bf16.mxu0 0
    %427 = vmatpush1.bf16.msra.mxu0 0
    %428 = vmatprep.subr.bf16.mxu0 0
    %429 = vmatpush1.bf16.msra.mxu0 0
    %430 = vmatprep.subr.bf16.mxu0 0
    %431 = vmatpush1.bf16.msra.mxu0 0
    %432 = vmatprep.subr.bf16.mxu0 0
    %433 = vmatpush1.bf16.msra.mxu0 0
    %434 = vmatprep.subr.bf16.mxu0 0
    %435 = vmatpush1.bf16.msra.mxu0 0
    %436 = vmatprep.mubr.bf16.mxu0 0
    %437 = vmatmul.mubr.bf16.gmra.mrb[0].mxu0 %v268
    %v438 = vpop.f32.mrb[0].mxu0
    %v439 = vadd.f32 0.0, %v438
    %v440 = vpop.f32.mrb[0].mxu0
    %v441 = vpop.f32.mrb[0].mxu0
    %v442 = vadd.f32 0.0, %v441
    %v443 = vpop.f32.mrb[0].mxu0
    %444 = vdwg.mxu0
    %s445 = scalar_lea.vmem [#allocation9], 48
    %446 = vst [vmem:[%s445] sm:$0xff] %v439
    %447 = vst [vmem:[%s445 + $0x8] sm:$0xff] %v442
    %v448 = vld [vmem:[#allocation2 + $0x20] sm:$0xff]
    %449 = vmatprep.subr.bf16.mxu0 0
    %450 = vmatpush1.bf16.msra.mxu0 %v448
    %451 = vmatprep.subr.bf16.mxu0 0
    %452 = vmatpush1.bf16.msra.mxu0 0
    %453 = vmatprep.subr.bf16.mxu0 0
    %454 = vmatpush1.bf16.msra.mxu0 0
    %455 = vmatprep.subr.bf16.mxu0 0
    %456 = vmatpush1.bf16.msra.mxu0 0
    %457 = vmatprep.subr.bf16.mxu0 0
    %458 = vmatpush1.bf16.msra.mxu0 0
    %459 = vmatprep.subr.bf16.mxu0 0
    %460 = vmatpush1.bf16.msra.mxu0 0
    %461 = vmatprep.subr.bf16.mxu0 0
    %462 = vmatpush1.bf16.msra.mxu0 0
    %463 = vmatprep.subr.bf16.mxu0 0
    %464 = vmatpush1.bf16.msra.mxu0 0
    %465 = vmatprep.subr.bf16.mxu0 0
    %466 = vmatpush1.bf16.msra.mxu0 0
    %467 = vmatprep.subr.bf16.mxu0 0
    %468 = vmatpush1.bf16.msra.mxu0 0
    %469 = vmatprep.subr.bf16.mxu0 0
    %470 = vmatpush1.bf16.msra.mxu0 0
    %471 = vmatprep.subr.bf16.mxu0 0
    %472 = vmatpush1.bf16.msra.mxu0 0
    %473 = vmatprep.subr.bf16.mxu0 0
    %474 = vmatpush1.bf16.msra.mxu0 0
    %475 = vmatprep.subr.bf16.mxu0 0
    %476 = vmatpush1.bf16.msra.mxu0 0
    %477 = vmatprep.subr.bf16.mxu0 0
    %478 = vmatpush1.bf16.msra.mxu0 0
    %479 = vmatprep.subr.bf16.mxu0 0
    %480 = vmatpush1.bf16.msra.mxu0 0
    %481 = vmatprep.mubr.bf16.mxu0 0
    %482 = vmatmul.mubr.bf16.gmra.mrb[0].mxu0 %v268
    %v483 = vpop.f32.mrb[0].mxu0
    %v484 = vadd.f32 0.0, %v483
    %v485 = vpop.f32.mrb[0].mxu0
    %v486 = vpop.f32.mrb[0].mxu0
    %v487 = vadd.f32 0.0, %v486
    %v488 = vpop.f32.mrb[0].mxu0
    %489 = vdwg.mxu0
    %s490 = scalar_lea.vmem [#allocation9], 64
    %491 = vst [vmem:[%s490] sm:$0xff] %v484
    %492 = vst [vmem:[%s490 + $0x8] sm:$0xff] %v487
    %v493 = vld [vmem:[#allocation2 + $0x28] sm:$0xff]
    %494 = vmatprep.subr.bf16.mxu0 0
    %495 = vmatpush1.bf16.msra.mxu0 %v493
    %496 = vmatprep.subr.bf16.mxu0 0
    %497 = vmatpush1.bf16.msra.mxu0 0
    %498 = vmatprep.subr.bf16.mxu0 0
    %499 = vmatpush1.bf16.msra.mxu0 0
    %500 = vmatprep.subr.bf16.mxu0 0
    %501 = vmatpush1.bf16.msra.mxu0 0
    %502 = vmatprep.subr.bf16.mxu0 0
    %503 = vmatpush1.bf16.msra.mxu0 0
    %504 = vmatprep.subr.bf16.mxu0 0
    %505 = vmatpush1.bf16.msra.mxu0 0
    %506 = vmatprep.subr.bf16.mxu0 0
    %507 = vmatpush1.bf16.msra.mxu0 0
    %508 = vmatprep.subr.bf16.mxu0 0
    %509 = vmatpush1.bf16.msra.mxu0 0
    %510 = vmatprep.subr.bf16.mxu0 0
    %511 = vmatpush1.bf16.msra.mxu0 0
    %512 = vmatprep.subr.bf16.mxu0 0
    %513 = vmatpush1.bf16.msra.mxu0 0
    %514 = vmatprep.subr.bf16.mxu0 0
    %515 = vmatpush1.bf16.msra.mxu0 0
    %516 = vmatprep.subr.bf16.mxu0 0
    %517 = vmatpush1.bf16.msra.mxu0 0
    %518 = vmatprep.subr.bf16.mxu0 0
    %519 = vmatpush1.bf16.msra.mxu0 0
    %520 = vmatprep.subr.bf16.mxu0 0
    %521 = vmatpush1.bf16.msra.mxu0 0
    %522 = vmatprep.subr.bf16.mxu0 0
    %523 = vmatpush1.bf16.msra.mxu0 0
    %524 = vmatprep.subr.bf16.mxu0 0
    %525 = vmatpush1.bf16.msra.mxu0 0
    %526 = vmatprep.mubr.bf16.mxu0 0
    %527 = vmatmul.mubr.bf16.gmra.mrb[0].mxu0 %v268
    %v528 = vpop.f32.mrb[0].mxu0
    %v529 = vadd.f32 0.0, %v528
    %v530 = vpop.f32.mrb[0].mxu0
    %v531 = vpop.f32.mrb[0].mxu0
    %v532 = vadd.f32 0.0, %v531
    %v533 = vpop.f32.mrb[0].mxu0
    %534 = vdwg.mxu0
    %s535 = scalar_lea.vmem [#allocation9], 80
    %536 = vst [vmem:[%s535] sm:$0xff] %v529
    %537 = vst [vmem:[%s535 + $0x8] sm:$0xff] %v532
    %v538 = vld [vmem:[#allocation2 + $0x30] sm:$0xff]
    %539 = vmatprep.subr.bf16.mxu0 0
    %540 = vmatpush1.bf16.msra.mxu0 %v538
    %541 = vmatprep.subr.bf16.mxu0 0
    %542 = vmatpush1.bf16.msra.mxu0 0
    %543 = vmatprep.subr.bf16.mxu0 0
    %544 = vmatpush1.bf16.msra.mxu0 0
    %545 = vmatprep.subr.bf16.mxu0 0
    %546 = vmatpush1.bf16.msra.mxu0 0
    %547 = vmatprep.subr.bf16.mxu0 0
    %548 = vmatpush1.bf16.msra.mxu0 0
    %549 = vmatprep.subr.bf16.mxu0 0
    %550 = vmatpush1.bf16.msra.mxu0 0
    %551 = vmatprep.subr.bf16.mxu0 0
    %552 = vmatpush1.bf16.msra.mxu0 0
    %553 = vmatprep.subr.bf16.mxu0 0
    %554 = vmatpush1.bf16.msra.mxu0 0
    %555 = vmatprep.subr.bf16.mxu0 0
    %556 = vmatpush1.bf16.msra.mxu0 0
    %557 = vmatprep.subr.bf16.mxu0 0
    %558 = vmatpush1.bf16.msra.mxu0 0
    %559 = vmatprep.subr.bf16.mxu0 0
    %560 = vmatpush1.bf16.msra.mxu0 0
    %561 = vmatprep.subr.bf16.mxu0 0
    %562 = vmatpush1.bf16.msra.mxu0 0
    %563 = vmatprep.subr.bf16.mxu0 0
    %564 = vmatpush1.bf16.msra.mxu0 0
    %565 = vmatprep.subr.bf16.mxu0 0
    %566 = vmatpush1.bf16.msra.mxu0 0
    %567 = vmatprep.subr.bf16.mxu0 0
    %568 = vmatpush1.bf16.msra.mxu0 0
    %569 = vmatprep.subr.bf16.mxu0 0
    %570 = vmatpush1.bf16.msra.mxu0 0
    %571 = vmatprep.mubr.bf16.mxu0 0
    %572 = vmatmul.mubr.bf16.gmra.mrb[0].mxu0 %v268
    %v573 = vpop.f32.mrb[0].mxu0
    %v574 = vadd.f32 0.0, %v573
    %v575 = vpop.f32.mrb[0].mxu0
    %v576 = vpop.f32.mrb[0].mxu0
    %v577 = vadd.f32 0.0, %v576
    %v578 = vpop.f32.mrb[0].mxu0
    %579 = vdwg.mxu0
    %s580 = scalar_lea.vmem [#allocation9], 96
    %581 = vst [vmem:[%s580] sm:$0xff] %v574
    %582 = vst [vmem:[%s580 + $0x8] sm:$0xff] %v577
    %v583 = vld [vmem:[#allocation2 + $0x38] sm:$0xff]
    %584 = vmatprep.subr.bf16.mxu0 0
    %585 = vmatpush1.bf16.msra.mxu0 %v583
    %586 = vmatprep.subr.bf16.mxu0 0
    %587 = vmatpush1.bf16.msra.mxu0 0
    %588 = vmatprep.subr.bf16.mxu0 0
    %589 = vmatpush1.bf16.msra.mxu0 0
    %590 = vmatprep.subr.bf16.mxu0 0
    %591 = vmatpush1.bf16.msra.mxu0 0
    %592 = vmatprep.subr.bf16.mxu0 0
    %593 = vmatpush1.bf16.msra.mxu0 0
    %594 = vmatprep.subr.bf16.mxu0 0
    %595 = vmatpush1.bf16.msra.mxu0 0
    %596 = vmatprep.subr.bf16.mxu0 0
    %597 = vmatpush1.bf16.msra.mxu0 0
    %598 = vmatprep.subr.bf16.mxu0 0
    %599 = vmatpush1.bf16.msra.mxu0 0
    %600 = vmatprep.subr.bf16.mxu0 0
    %601 = vmatpush1.bf16.msra.mxu0 0
    %602 = vmatprep.subr.bf16.mxu0 0
    %603 = vmatpush1.bf16.msra.mxu0 0
    %604 = vmatprep.subr.bf16.mxu0 0
    %605 = vmatpush1.bf16.msra.mxu0 0
    %606 = vmatprep.subr.bf16.mxu0 0
    %607 = vmatpush1.bf16.msra.mxu0 0
    %608 = vmatprep.subr.bf16.mxu0 0
    %609 = vmatpush1.bf16.msra.mxu0 0
    %610 = vmatprep.subr.bf16.mxu0 0
    %611 = vmatpush1.bf16.msra.mxu0 0
    %612 = vmatprep.subr.bf16.mxu0 0
    %613 = vmatpush1.bf16.msra.mxu0 0
    %614 = vmatprep.subr.bf16.mxu0 0
    %615 = vmatpush1.bf16.msra.mxu0 0
    %616 = vmatprep.mubr.bf16.mxu0 0
    %617 = vmatmul.mubr.bf16.gmra.mrb[0].mxu0 %v268
    %v618 = vpop.f32.mrb[0].mxu0
    %v619 = vadd.f32 0.0, %v618
    %v620 = vpop.f32.mrb[0].mxu0
    %v621 = vpop.f32.mrb[0].mxu0
    %v622 = vadd.f32 0.0, %v621
    %v623 = vpop.f32.mrb[0].mxu0
    %624 = vdwg.mxu0
    %s625 = scalar_lea.vmem [#allocation9], 112
    %626 = vst [vmem:[%s625] sm:$0xff] %v619
    %627 = vst [vmem:[%s625 + $0x8] sm:$0xff] %v622
    // Predicated region
    $region26: #{_bilinear_resize_impl.1} parent=1 // pred_check
      _
    $region27: #{_bilinear_resize_impl.1} parent=1 // pred_check_branch
      %629 = sbr.rel (0) target = $region29
    $region28: #{_bilinear_resize_impl.1} parent=1 // pred_region
      %s631 = ssub.s32 2048, 2048
      %632 = vsyncadd [#allocation5], %s631
      %s633 = sshll.u32 [#allocation9], 4
      %s634 = int_to_ptr.vmem [resolvable:$true] %s633
      %639 = dma.vmem_to_hbm [thread:$0]  %s634, 2048, %s3, [#allocation5], 128, 128, 8
    $region29: #{_bilinear_resize_impl.1} parent=1 // pred_fallthru
      _
    // Predicated region
    $region30: #{_bilinear_resize_impl.1} parent=1 // pred_check
      _
    $region31: #{_bilinear_resize_impl.1} parent=1 // pred_check_branch
      %641 = sbr.rel (0) target = $region33
    $region32: #{_bilinear_resize_impl.1} parent=1 // pred_region
      %642 = dma.done [#allocation5], 2048
    $region33: #{_bilinear_resize_impl.1} parent=1 // pred_fallthru
      _
    %643 = vsyncpa [#allocation4], 1
    %644 = vsyncpa [#allocation7], 1
    %645 = vsyncpa [#allocation5], 1

</llo_original>
